<compile_context>
chip_gen: v6e
topology: v6e:2x2x1
jax: 0.10.0
libtpu: 0.0.40
codegen_flags: <defaults>
</compile_context>

<pallas_src>
import functools

import jax
import jax.numpy as jnp
from jax.experimental import pallas as pl
from jax.experimental.pallas import tpu as pltpu


# ---------------------------------------------------------------------------
# Stateless dropout mask: murmur3-style finalizer over global element indices.
# All int32 ops -> lowers on TPU Mosaic and in interpret mode.
# ---------------------------------------------------------------------------
def _srl32(v, n):
    """Logical right shift of an int32 array by a static amount n."""
    mask = jnp.int32((1 << (32 - n)) - 1)
    return jnp.bitwise_and(jnp.right_shift(v, n), mask)


def _hash_keep_mask(seed, shape, row_offset, threshold_signed):
    rows = jax.lax.broadcasted_iota(jnp.int32, shape, 0) + row_offset
    cols = jax.lax.broadcasted_iota(jnp.int32, shape, 1)
    h = rows * jnp.int32(shape[1]) + cols          # global element index (wraps OK)
    h = h ^ seed
    h = h ^ _srl32(h, 16)
    h = h * jnp.int32(-2048144789)                 # 0x85EBCA6B
    h = h ^ _srl32(h, 13)
    h = h * jnp.int32(-1028477387)                 # 0xC2B2AE35
    h = h ^ _srl32(h, 16)
    # h is uniform over the full int32 range; keep with prob (1 - p).
    return h >= jnp.int32(threshold_signed)


# ---------------------------------------------------------------------------
# Fused kernel: LayerNorm -> Linear -> dropout -> residual add, one row tile.
# ---------------------------------------------------------------------------
def _sublayer_kernel(seed_ref, x_ref, gamma_ref, beta_ref, w_ref, b_ref, o_ref,
                     *, eps, dropout_p):
    x = x_ref[...].astype(jnp.float32)             # (tm, H) residual input
    tm, hid = x.shape

    # ---- LayerNorm (unbiased std, eps added to std) ----
    mean = jnp.mean(x, axis=-1, keepdims=True)
    diff = x - mean
    var = jnp.sum(diff * diff, axis=-1, keepdims=True) / (hid - 1)
    inv = 1.0 / (jnp.sqrt(var) + eps)              # (tm, 1): one divide per row
    normed = gamma_ref[...].astype(jnp.float32) * (diff * inv) \
        + beta_ref[...].astype(jnp.float32)

    # ---- Linear sublayer on the MXU, f32 accumulation ----
    y = jnp.dot(normed.astype(w_ref.dtype), w_ref[...],
                preferred_element_type=jnp.float32)
    y = y + b_ref[...].astype(jnp.float32)

    # ---- Dropout (training semantics) ----
    if dropout_p >= 1.0:
        y = jnp.zeros_like(y)                      # p == 1: drop everything
    elif dropout_p > 0.0:
        thr = int(round(dropout_p * 4294967296.0)) - 2147483648
        thr = max(-2147483648, min(thr, 2147483647))
        row_off = pl.program_id(0) * tm            # unique stream per row tile
        keep = _hash_keep_mask(seed_ref[0], (tm, hid), row_off, thr)
        y = jnp.where(keep, y, 0.0) * jnp.float32(1.0 / (1.0 - dropout_p))

    # ---- Residual add ----
    o_ref[...] = (x + y).astype(o_ref.dtype)


# ---------------------------------------------------------------------------
# Wrapper: row-tiled, pipelined pallas_call.
# ---------------------------------------------------------------------------
def _row_tile(rows, target=256):
    if rows <= target:
        return rows
    t = (target // 8) * 8
    while t >= 8:                                  # prefer an exact divisor (mult of 8)
        if rows % t == 0:
            return t
        t -= 8
    return target                                  # partial tail block; Pallas masks it


def sublayer_connection(x, gamma, beta, w, b, *, dropout_p=0.0, seed=0, eps=1e-6,
                        row_tile=None):
    """x: (B, S, H); gamma/beta/b: (H,); w: (H, H). Returns (B, S, H)."""
    B, S, H = x.shape
    R = B * S
    x2 = x.reshape(R, H)
    tm = row_tile if row_tile is not None else _row_tile(R)
    grid = (pl.cdiv(R, tm),)

    gamma2 = gamma.reshape(1, H)
    beta2 = beta.reshape(1, H)
    b2 = b.reshape(1, H)
    seed_arr = jnp.asarray([seed], dtype=jnp.int32)

    out2 = pl.pallas_call(
        functools.partial(_sublayer_kernel, eps=eps, dropout_p=float(dropout_p)),
        out_shape=jax.ShapeDtypeStruct((R, H), x.dtype),
        grid_spec=pltpu.PrefetchScalarGridSpec(
            num_scalar_prefetch=1,                 # seed -> SMEM
            grid=grid,
            in_specs=[
                pl.BlockSpec((tm, H), lambda i, seed: (i, 0)),   # x row tile
                pl.BlockSpec((1, H), lambda i, seed: (0, 0)),    # gamma (VMEM-resident)
                pl.BlockSpec((1, H), lambda i, seed: (0, 0)),    # beta  (VMEM-resident)
                pl.BlockSpec((H, H), lambda i, seed: (0, 0)),    # weight (VMEM-resident)
                pl.BlockSpec((1, H), lambda i, seed: (0, 0)),    # bias  (VMEM-resident)
            ],
            out_specs=pl.BlockSpec((tm, H), lambda i, seed: (i, 0)),
        ),
        compiler_params=pltpu.CompilerParams(
            dimension_semantics=("parallel",)),    # shard row tiles across TCs (v7x)
    )(seed_arr, x2, gamma2, beta2, w, b2)
    return out2.reshape(B, S, H)


# Pure-JAX reference (eval mode, p = 0) for correctness checking.
def _reference_eval(x, gamma, beta, w, b, eps=1e-6):
    mean = jnp.mean(x, axis=-1, keepdims=True)
    n = x.shape[-1]
    var = jnp.sum((x - mean) ** 2, axis=-1, keepdims=True) / (n - 1)
    std = jnp.sqrt(var)
    normed = gamma * (x - mean) / (std + eps) + beta
    y = normed @ w + b
    return x + y


if __name__ == "__main__":
    B, S, H = 2, 8, 32
    key = jax.random.PRNGKey(0)
    kx, kw, kb = jax.random.split(key, 3)

    x = jax.random.normal(kx, (B, S, H), dtype=jnp.float32)

    # LayerNorm params (module init: ones / zeros)
    gamma = jnp.ones((H,), dtype=jnp.float32)
    beta = jnp.zeros((H,), dtype=jnp.float32)

    # Example sublayer: deterministic small Linear(H, H)
    w = jax.random.normal(kw, (H, H), dtype=jnp.float32) * 0.05
    b = jax.random.normal(kb, (H,), dtype=jnp.float32) * 0.05

    # 1) eval mode (p = 0): must match the pure-JAX reference of the PyTorch module
    out_eval = sublayer_connection(x, gamma, beta, w, b, dropout_p=0.0, seed=0)
    jax.block_until_ready(out_eval)
    ref = _reference_eval(x, gamma, beta, w, b)
    assert out_eval.shape == (B, S, H)
    assert jnp.allclose(out_eval, ref, atol=1e-4, rtol=1e-4), "mismatch vs reference"

    # 2) training mode (p = 0.1) with a deterministic seed
    out_train = sublayer_connection(x, gamma, beta, w, b, dropout_p=0.1, seed=1234)
    jax.block_until_ready(out_train)
    assert out_train.shape == (B, S, H)
    assert bool(jnp.all(jnp.isfinite(out_train)))

    # Determinism: same seed -> identical dropout mask / output
    out_train2 = sublayer_connection(x, gamma, beta, w, b, dropout_p=0.1, seed=1234)
    jax.block_until_ready(out_train2)
    assert jnp.array_equal(out_train, out_train2)

    print("KERNEL_OK")
</pallas_src>

<mosaic_0001>
module attributes {stable_mosaic.version = 11 : i64} {
  func.func @_sublayer_kernel(%arg0: i32, %arg1: memref<1xi32, #tpu.memory_space<smem>>, %arg2: memref<16x32xf32, #tpu.memory_space<vmem>>, %arg3: memref<1x32xf32, #tpu.memory_space<vmem>>, %arg4: memref<1x32xf32, #tpu.memory_space<vmem>>, %arg5: memref<32x32xf32, #tpu.memory_space<vmem>>, %arg6: memref<1x32xf32, #tpu.memory_space<vmem>>, %arg7: memref<16x32xf32, #tpu.memory_space<vmem>>) attributes {dimension_semantics = [#tpu.dimension_semantics<parallel>], iteration_bounds = array<i64: 1>, scalar_prefetch = 1 : i64, scratch_operands = 0 : i64, tpu.core_type = #tpu.core_type<tc>, window_params = [{transform_indices = @transform_0, window_bounds = array<i64: 16, 32>}, {pipeline_mode = #tpu.pipeline_mode<synchronous>, transform_indices = @transform_1, window_bounds = array<i64: 1, 32>}, {pipeline_mode = #tpu.pipeline_mode<synchronous>, transform_indices = @transform_2, window_bounds = array<i64: 1, 32>}, {pipeline_mode = #tpu.pipeline_mode<synchronous>, transform_indices = @transform_3, window_bounds = array<i64: 32, 32>}, {pipeline_mode = #tpu.pipeline_mode<synchronous>, transform_indices = @transform_4, window_bounds = array<i64: 1, 32>}, {transform_indices = @transform_5, window_bounds = array<i64: 16, 32>}]} {
    %c0 = arith.constant 0 : index
    %c0_0 = arith.constant 0 : index
    %0 = vector.load %arg2[%c0, %c0_0] : memref<16x32xf32, #tpu.memory_space<vmem>>, vector<16x32xf32>
    %cst = arith.constant dense<0.000000e+00> : vector<16xf32>
    %1 = vector.multi_reduction <add>, %0, %cst [1] : vector<16x32xf32> to vector<16xf32>
    %2 = vector.shape_cast %1 : vector<16xf32> to vector<16x1xf32>
    %cst_1 = arith.constant 3.200000e+01 : f32
    %3 = vector.broadcast %cst_1 : f32 to vector<16x1xf32>
    %4 = arith.divf %2, %3 : vector<16x1xf32>
    %5 = vector.broadcast %4 : vector<16x1xf32> to vector<16x32xf32>
    %6 = arith.subf %0, %5 : vector<16x32xf32>
    %7 = arith.mulf %6, %6 : vector<16x32xf32>
    %cst_2 = arith.constant dense<0.000000e+00> : vector<16xf32>
    %8 = vector.multi_reduction <add>, %7, %cst_2 [1] : vector<16x32xf32> to vector<16xf32>
    %9 = vector.shape_cast %8 : vector<16xf32> to vector<16x1xf32>
    %cst_3 = arith.constant 3.100000e+01 : f32
    %10 = vector.broadcast %cst_3 : f32 to vector<16x1xf32>
    %11 = arith.divf %9, %10 : vector<16x1xf32>
    %12 = math.sqrt %11 : vector<16x1xf32>
    %cst_4 = arith.constant 9.99999997E-7 : f32
    %13 = vector.broadcast %cst_4 : f32 to vector<16x1xf32>
    %14 = arith.addf %12, %13 : vector<16x1xf32>
    %cst_5 = arith.constant 1.000000e+00 : f32
    %15 = vector.broadcast %cst_5 : f32 to vector<16x1xf32>
    %16 = arith.divf %15, %14 : vector<16x1xf32>
    %c0_6 = arith.constant 0 : index
    %c0_7 = arith.constant 0 : index
    %17 = vector.load %arg3[%c0_6, %c0_7] : memref<1x32xf32, #tpu.memory_space<vmem>>, vector<1x32xf32>
    %18 = vector.broadcast %16 : vector<16x1xf32> to vector<16x32xf32>
    %19 = arith.mulf %6, %18 : vector<16x32xf32>
    %20 = vector.broadcast %17 : vector<1x32xf32> to vector<16x32xf32>
    %21 = arith.mulf %20, %19 : vector<16x32xf32>
    %c0_8 = arith.constant 0 : index
    %c0_9 = arith.constant 0 : index
    %22 = vector.load %arg4[%c0_8, %c0_9] : memref<1x32xf32, #tpu.memory_space<vmem>>, vector<1x32xf32>
    %23 = vector.broadcast %22 : vector<1x32xf32> to vector<16x32xf32>
    %24 = arith.addf %21, %23 : vector<16x32xf32>
    %c0_10 = arith.constant 0 : index
    %c0_11 = arith.constant 0 : index
    %25 = vector.load %arg5[%c0_10, %c0_11] : memref<32x32xf32, #tpu.memory_space<vmem>>, vector<32x32xf32>
    %cst_12 = arith.constant dense<0.000000e+00> : vector<16x32xf32>
    %26 = tpu.matmul %24, %25, %cst_12 {dimension_numbers = #tpu.dot_dimension_numbers<[1], [0], [0], [1], [0, 0, 1, 1], [], []>} : vector<16x32xf32>, vector<32x32xf32>, vector<16x32xf32> -> vector<16x32xf32>
    %c0_13 = arith.constant 0 : index
    %c0_14 = arith.constant 0 : index
    %27 = vector.load %arg6[%c0_13, %c0_14] : memref<1x32xf32, #tpu.memory_space<vmem>>, vector<1x32xf32>
    %28 = vector.broadcast %27 : vector<1x32xf32> to vector<16x32xf32>
    %29 = arith.addf %26, %28 : vector<16x32xf32>
    %30 = arith.addf %0, %29 : vector<16x32xf32>
    %c0_15 = arith.constant 0 : index
    %c0_16 = arith.constant 0 : index
    %31 = vector.load %arg7[%c0_15, %c0_16] : memref<16x32xf32, #tpu.memory_space<vmem>>, vector<16x32xf32>
    tpu.vector_store %arg7[%c0_15, %c0_16], %30 {strides = array<i32>} : memref<16x32xf32, #tpu.memory_space<vmem>>, vector<16x32xf32>,
    return
  }
  func.func @transform_0(%arg0: i32, %arg1: memref<1xi32, #tpu.memory_space<smem>>) -> (i32, i32) {
    %c0_i32 = arith.constant 0 : i32
    %c0_i32_0 = arith.constant 0 : i32
    return %arg0, %c0_i32 : i32, i32
  }
  func.func @transform_1(%arg0: i32, %arg1: memref<1xi32, #tpu.memory_space<smem>>) -> (i32, i32) {
    %c0_i32 = arith.constant 0 : i32
    %c0_i32_0 = arith.constant 0 : i32
    %c0_i32_1 = arith.constant 0 : i32
    return %c0_i32, %c0_i32_0 : i32, i32
  }
  func.func @transform_2(%arg0: i32, %arg1: memref<1xi32, #tpu.memory_space<smem>>) -> (i32, i32) {
    %c0_i32 = arith.constant 0 : i32
    %c0_i32_0 = arith.constant 0 : i32
    %c0_i32_1 = arith.constant 0 : i32
    return %c0_i32, %c0_i32_0 : i32, i32
  }
  func.func @transform_3(%arg0: i32, %arg1: memref<1xi32, #tpu.memory_space<smem>>) -> (i32, i32) {
    %c0_i32 = arith.constant 0 : i32
    %c0_i32_0 = arith.constant 0 : i32
    %c0_i32_1 = arith.constant 0 : i32
    return %c0_i32, %c0_i32_0 : i32, i32
  }
  func.func @transform_4(%arg0: i32, %arg1: memref<1xi32, #tpu.memory_space<smem>>) -> (i32, i32) {
    %c0_i32 = arith.constant 0 : i32
    %c0_i32_0 = arith.constant 0 : i32
    %c0_i32_1 = arith.constant 0 : i32
    return %c0_i32, %c0_i32_0 : i32, i32
  }
  func.func @transform_5(%arg0: i32, %arg1: memref<1xi32, #tpu.memory_space<smem>>) -> (i32, i32) {
    %c0_i32 = arith.constant 0 : i32
    %c0_i32_0 = arith.constant 0 : i32
    return %arg0, %c0_i32 : i32, i32
  }
}

</mosaic_0001>

<llo_original>
// kernel: tpu_custom_call.1
$region0: #{tpu_custom_call.1}
  #allocation0 [shape = 'u32[]', space=smem, size = 0x4, offset = 0x4, fixed_abs, tag = 'smem constant byte address 0x4 - core index']
  #allocation1 [shape = 'u32[144,128]{1,0:T(1,128)}', space=vmem, size = 0x12000, scoped, tag = 'internal scratch']
  #allocation2 [shape = 's32[1]{0}', space=sflag, size = 0x4, scoped, tag = 'scoped memory for tpu_custom_call.1']
  #allocation3 [shape = 's32[1]{0:T(128)S(6)}', space=smem, size = 0x200, scoped, tag = 'prefetched SMEM operand 0']
  %s0 = inlined_call_operand.<no memory space> [shape: s32[1], index: 0, kind: input, shape index: {}]
  %s1 = inlined_call_operand.hbm [shape: f32[16,32], index: 1, kind: input, shape index: {}]
  %s2 = inlined_call_operand.vmem [shape: f32[1,32], index: 2, kind: input, shape index: {}]
  %s3 = inlined_call_operand.vmem [shape: f32[1,32], index: 3, kind: input, shape index: {}]
  %s4 = inlined_call_operand.hbm [shape: f32[32,32], index: 4, kind: input, shape index: {}]
  %s5 = inlined_call_operand.vmem [shape: f32[1,32], index: 5, kind: input, shape index: {}]
  %s6 = inlined_call_operand.hbm [shape: f32[16,32], index: 6, kind: output, shape index: {}]
  %s7 = sld [smem:[#allocation0]]
  $region38: #{tpu_custom_call.1} parent=0
    _
  %s9 = ssub.s32 1, %s7
  %s10 = scalar_select 0, %s9, %s7
  %11 = sst [smem:[#allocation3]] %s0
  $region1: #{tpu_custom_call.1} parent=0
    #allocation4 [shape = 'u8[8192]{0}', space=vmem, size = 0x2000, scoped, tag = 'input window, operand 1, single buffered']
    #allocation5 [shape = 's32[1]{0}', space=sflag, size = 0x4, scoped, tag = 'scoped memory for tpu_custom_call.1']
    #allocation6 [shape = 's32[1]{0}', space=sflag, size = 0x4, scoped, tag = 'scoped memory for tpu_custom_call.1']
    #allocation7 [shape = 'u8[16384]{0}', space=vmem, size = 0x4000, scoped, tag = 'input window, operand 4, single buffered']
    #allocation8 [shape = 's32[1]{0}', space=sflag, size = 0x4, scoped, tag = 'scoped memory for tpu_custom_call.1']
    #allocation9 [shape = 'u8[8192]{0}', space=vmem, size = 0x2000, scoped, tag = 'output window, operand 0, single buffered']
    %12 = vsyncpa [#allocation5], 0
    %13 = vsyncpa [#allocation8], 0
    %14 = vsyncpa [#allocation6], 0
    // Predicated region
    $region2: #{tpu_custom_call.1} parent=1 // pred_check
      _
    $region3: #{tpu_custom_call.1} parent=1 // pred_check_branch
      %16 = sbr.rel (0) target = $region5
    $region4: #{tpu_custom_call.1} parent=1 // pred_region
      %s18 = ssub.s32 256, 256
      %19 = vsyncadd [#allocation5], %s18
      %s20 = sshll.u32 [#allocation4], 4
      %s21 = int_to_ptr.vmem [resolvable:$true] %s20
      %26 = dma.hbm_to_vmem [thread:$0]  %s1, 256, %s21, [#allocation5], 128, 128, 8
    $region5: #{tpu_custom_call.1} parent=1 // pred_fallthru
      _
    // Predicated region
    $region6: #{tpu_custom_call.1} parent=1 // pred_check
      _
    $region7: #{tpu_custom_call.1} parent=1 // pred_check_branch
      %28 = sbr.rel (0) target = $region9
    $region8: #{tpu_custom_call.1} parent=1 // pred_region
      _
    $region9: #{tpu_custom_call.1} parent=1 // pred_fallthru
      _
    // Predicated region
    $region10: #{tpu_custom_call.1} parent=1 // pred_check
      _
    $region11: #{tpu_custom_call.1} parent=1 // pred_check_branch
      %30 = sbr.rel (0) target = $region13
    $region12: #{tpu_custom_call.1} parent=1 // pred_region
      _
    $region13: #{tpu_custom_call.1} parent=1 // pred_fallthru
      _
    // Predicated region
    $region14: #{tpu_custom_call.1} parent=1 // pred_check
      _
    $region15: #{tpu_custom_call.1} parent=1 // pred_check_branch
      %32 = sbr.rel (0) target = $region17
    $region16: #{tpu_custom_call.1} parent=1 // pred_region
      %s34 = ssub.s32 512, 512
      %35 = vsyncadd [#allocation8], %s34
      %s36 = sshll.u32 [#allocation7], 4
      %s37 = int_to_ptr.vmem [resolvable:$true] %s36
      %42 = dma.hbm_to_vmem [thread:$0]  %s4, 512, %s37, [#allocation8], 128, 128, 8
    $region17: #{tpu_custom_call.1} parent=1 // pred_fallthru
      _
    // Predicated region
    $region18: #{tpu_custom_call.1} parent=1 // pred_check
      _
    $region19: #{tpu_custom_call.1} parent=1 // pred_check_branch
      %44 = sbr.rel (0) target = $region21
    $region20: #{tpu_custom_call.1} parent=1 // pred_region
      _
    $region21: #{tpu_custom_call.1} parent=1 // pred_fallthru
      _
    // Predicated region
    $region22: #{tpu_custom_call.1} parent=1 // pred_check
      _
    $region23: #{tpu_custom_call.1} parent=1 // pred_check_branch
      %46 = sbr.rel (0) target = $region25
    $region24: #{tpu_custom_call.1} parent=1 // pred_region
      %47 = dma.done [#allocation5], 256
    $region25: #{tpu_custom_call.1} parent=1 // pred_fallthru
      _
    // Predicated region
    $region26: #{tpu_custom_call.1} parent=1 // pred_check
      _
    $region27: #{tpu_custom_call.1} parent=1 // pred_check_branch
      %49 = sbr.rel (0) target = $region29
    $region28: #{tpu_custom_call.1} parent=1 // pred_region
      %50 = dma.done [#allocation8], 512
    $region29: #{tpu_custom_call.1} parent=1 // pred_fallthru
      _
    %v51 = vld [vmem:[#allocation4] sm:$0xff]
    %v52 = vld [vmem:[#allocation4 + $0x8] sm:$0xff]
    %vm53 = vcmask 261120
    %v54 = vsel %vm53, %v51, 0.0
    %55 = vadd.xlane.f32.xlu0 %v54
    %v56 = vpop.xlane.xlu0 %55
    %v57 = vsel %vm53, %v52, 0.0
    %58 = vadd.xlane.f32.xlu0 %v57
    %v59 = vpop.xlane.xlu0 %58
    %v60 = vrcp.pop 32.0
    %v61 = vmul.f32 %v56, %v60
    %v62 = vmul.f32 %v59, %v60
    %v63 = vsub.f32 %v51, %v61
    %v64 = vsub.f32 %v52, %v62
    %v65 = vmul.f32 %v63, %v63
    %v66 = vmul.f32 %v64, %v64
    %v67 = vsel %vm53, %v65, 0.0
    %68 = vadd.xlane.f32.xlu0 %v67
    %v69 = vpop.xlane.xlu0 %68
    %v70 = vsel %vm53, %v66, 0.0
    %71 = vadd.xlane.f32.xlu0 %v70
    %v72 = vpop.xlane.xlu0 %71
    %v73 = vrcp.pop 31.0
    %v74 = vmul.f32 %v69, %v73
    %v75 = vmul.f32 %v72, %v73
    %v76 = vrsqrt.pop %v74
    %v77 = vmul.f32 %v74, %v76
    %vm78 = vcmp.eq.f32.partialorder %v74, inf
    %v79 = vsel %vm78, %v74, %v77
    %vm80 = vcmp.eq.f32.partialorder %v74, 0.0
    %v81 = vand.u32 %v74, 2147483648
    %v82 = vsel %vm80, %v81, %v79
    %v83 = vrsqrt.pop %v75
    %v84 = vmul.f32 %v75, %v83
    %vm85 = vcmp.eq.f32.partialorder %v75, inf
    %v86 = vsel %vm85, %v75, %v84
    %vm87 = vcmp.eq.f32.partialorder %v75, 0.0
    %v88 = vand.u32 %v75, 2147483648
    %v89 = vsel %vm87, %v88, %v86
    %v90 = vadd.f32 %v82, 1e-06
    %v91 = vadd.f32 %v89, 1e-06
    %v92 = vrcp.pop %v90
    %v93 = vmul.f32 1.0, %v92
    %v94 = vrcp.pop %v91
    %v95 = vmul.f32 1.0, %v94
    %v96 = vld [vmem:[%s2] sm:$0x1]
    %v97 = vmul.f32 %v63, %v93
    %v98 = vmul.f32 %v64, %v95
    %v100 = vlaneseq
    %v101 = vshrl.u32 %v100, 7
    %v102 = vsub.s32 0, %v101
    %v103 = vrot.slane %v96, %v102
    %v105 = vmul.f32 %v103, %v97
    %v106 = vmul.f32 %v103, %v98
    %v107 = vld [vmem:[%s3] sm:$0x1]
    %v109 = vlaneseq
    %v110 = vshrl.u32 %v109, 7
    %v111 = vsub.s32 0, %v110
    %v112 = vrot.slane %v107, %v111
    %v114 = vadd.f32 %v105, %v112
    %v115 = vadd.f32 %v106, %v112
    %v116 = vld [vmem:[#allocation7] sm:$0xff]
    %v117 = vld [vmem:[#allocation7 + $0x8] sm:$0xff]
    %v118 = vld [vmem:[#allocation7 + $0x10] sm:$0xff]
    %v119 = vld [vmem:[#allocation7 + $0x18] sm:$0xff]
    %v120 = vld [vmem:[%s5] sm:$0x1]
    %v122 = vlaneseq
    %v123 = vshrl.u32 %v122, 7
    %v124 = vsub.s32 0, %v123
    %v125 = vrot.slane %v120, %v124
    %v128 = vsel %vm53, %v114, 0
    %v131 = vsel %vm53, %v115, 0
    %133 = vmatprep.subr.mxu0 0.0
    %134 = vmatpush1.msra.mxu0 0.0
    %135 = vmatprep.subr.mxu0 0.0
    %136 = vmatpush1.msra.mxu0 0.0
    %137 = vmatprep.subr.mxu0 0.0
    %138 = vmatpush1.msra.mxu0 0.0
    %139 = vmatprep.subr.mxu0 0.0
    %140 = vmatpush1.msra.mxu0 0.0
    %141 = vmatprep.subr.mxu0 0.0
    %142 = vmatpush1.msra.mxu0 0.0
    %143 = vmatprep.subr.mxu0 0.0
    %144 = vmatpush1.msra.mxu0 0.0
    %145 = vmatprep.subr.mxu0 0.0
    %146 = vmatpush1.msra.mxu0 0.0
    %147 = vmatprep.subr.mxu0 0.0
    %148 = vmatpush1.msra.mxu0 0.0
    %149 = vmatprep.subr.mxu0 0.0
    %150 = vmatpush1.msra.mxu0 0.0
    %151 = vmatprep.subr.mxu0 0.0
    %152 = vmatpush1.msra.mxu0 0.0
    %153 = vmatprep.subr.mxu0 0.0
    %154 = vmatpush1.msra.mxu0 0.0
    %155 = vmatprep.subr.mxu0 0.0
    %156 = vmatpush1.msra.mxu0 0.0
    %157 = vmatprep.subr.mxu0 0.0
    %158 = vmatpush1.msra.mxu0 %v119
    %159 = vmatprep.subr.mxu0 0.0
    %160 = vmatpush1.msra.mxu0 %v118
    %161 = vmatprep.subr.mxu0 0.0
    %162 = vmatpush1.msra.mxu0 %v117
    %163 = vmatprep.subr.mxu0 0.0
    %164 = vmatpush1.msra.mxu0 %v116
    %165 = vmatprep.subr.mxu0 0.0
    %166 = vmatpush2.msra.mxu0 0.0
    %167 = vmatprep.subr.mxu0 0.0
    %168 = vmatpush2.msra.mxu0 0.0
    %169 = vmatprep.subr.mxu0 0.0
    %170 = vmatpush2.msra.mxu0 0.0
    %171 = vmatprep.subr.mxu0 0.0
    %172 = vmatpush2.msra.mxu0 0.0
    %173 = vmatprep.subr.mxu0 0.0
    %174 = vmatpush2.msra.mxu0 0.0
    %175 = vmatprep.subr.mxu0 0.0
    %176 = vmatpush2.msra.mxu0 0.0
    %177 = vmatprep.subr.mxu0 0.0
    %178 = vmatpush2.msra.mxu0 0.0
    %179 = vmatprep.subr.mxu0 0.0
    %180 = vmatpush2.msra.mxu0 0.0
    %181 = vmatprep.subr.mxu0 0.0
    %182 = vmatpush2.msra.mxu0 0.0
    %183 = vmatprep.subr.mxu0 0.0
    %184 = vmatpush2.msra.mxu0 0.0
    %185 = vmatprep.subr.mxu0 0.0
    %186 = vmatpush2.msra.mxu0 0.0
    %187 = vmatprep.subr.mxu0 0.0
    %188 = vmatpush2.msra.mxu0 0.0
    %189 = vmatprep.subr.mxu0 0.0
    %190 = vmatpush2.msra.mxu0 0.0
    %191 = vmatprep.subr.mxu0 0.0
    %192 = vmatpush2.msra.mxu0 0.0
    %193 = vmatprep.subr.mxu0 0.0
    %194 = vmatpush2.msra.mxu0 0.0
    %195 = vmatprep.subr.mxu0 0.0
    %196 = vmatpush2.msra.mxu0 0.0
    %197 = vmatprep.mubr.f32.mxu0 0.0
    %198 = vmatmul.mubr.f32.gmra.mxu0 %v128
    %v199 = vpop.f32.mrf.mxu0
    %v200 = vadd.f32 %v125, %v199
    %v201 = vpop.f32.mrf.mxu0
    %202 = vmatprep.mubr.f32.mxu0 0.0
    %203 = vmatmul.mubr.f32.gmra.mxu0 %v131
    %v204 = vpop.f32.mrf.mxu0
    %v205 = vadd.f32 %v125, %v204
    %v206 = vpop.f32.mrf.mxu0
    %207 = vdwg.mxu0
    %v208 = vadd.f32 %v51, %v200
    %v209 = vadd.f32 %v52, %v205
    %210 = vst.msk [vmem:[#allocation9] sm:$0xff] %vm53, %v208
    %211 = vst.msk [vmem:[#allocation9 + $0x8] sm:$0xff] %vm53, %v209
    // Predicated region
    $region30: #{tpu_custom_call.1} parent=1 // pred_check
      _
    $region31: #{tpu_custom_call.1} parent=1 // pred_check_branch
      %213 = sbr.rel (0) target = $region33
    $region32: #{tpu_custom_call.1} parent=1 // pred_region
      %s215 = ssub.s32 256, 256
      %216 = vsyncadd [#allocation6], %s215
      %s217 = sshll.u32 [#allocation9], 4
      %s218 = int_to_ptr.vmem [resolvable:$true] %s217
      %223 = dma.vmem_to_hbm [thread:$0]  %s218, 256, %s6, [#allocation6], 128, 128, 8
    $region33: #{tpu_custom_call.1} parent=1 // pred_fallthru
      _
    // Predicated region
    $region34: #{tpu_custom_call.1} parent=1 // pred_check
      _
    $region35: #{tpu_custom_call.1} parent=1 // pred_check_branch
      %225 = sbr.rel (0) target = $region37
    $region36: #{tpu_custom_call.1} parent=1 // pred_region
      %226 = dma.done [#allocation6], 256
    $region37: #{tpu_custom_call.1} parent=1 // pred_fallthru
      _
    %227 = vsyncpa [#allocation5], 1
    %228 = vsyncpa [#allocation8], 1
    %229 = vsyncpa [#allocation6], 1

</llo_original>
